<compile_context>
chip_gen: v7x
topology: tpu7x:2x2x1
jax: 0.10.0
libtpu: 0.0.40
codegen_flags: <defaults>
</compile_context>

<pallas_src>
import functools

import jax
import jax.numpy as jnp
from jax.experimental import pallas as pl
from jax.experimental.pallas import tpu as pltpu


def _fused_base_learner_kernel(*refs, n_layers, inv_m, eps, matmul_dtype):
    """Fused forward over the whole (C, M = N*L) slab resident in VMEM.

    Per layer:
      y = W @ act                      (MXU, f32 accumulate; conv bias omitted — it cancels
                                        exactly under training-mode BatchNorm centering)
      mean / var from one sum + sum-of-squares sweep (lane-axis reduces on the XLU)
      y = y * scale + shift            with scale = gamma*rsqrt(var+eps), shift = beta - mean*scale
      ReLU                             (all layers except the last)

    refs layout:
      refs[0]               x       (C_in, M)   f32
      refs[1 + 3*i + 0]     W_i     (Cout_i, Cin_i)
      refs[1 + 3*i + 1]     gamma_i (Cout_i, 1)
      refs[1 + 3*i + 2]     beta_i  (Cout_i, 1)
      refs[1 + 3*n_layers]  out     (Cout_last, M)
    """
    x_ref = refs[0]
    o_ref = refs[1 + 3 * n_layers]

    act = x_ref[...]                                      # (C_in, M) f32, VMEM resident

    for i in range(n_layers):                             # static unroll (layer count is static)
        w = refs[1 + 3 * i][...]                          # (Cout, Cin)
        gamma = refs[2 + 3 * i][...]                      # (Cout, 1)
        beta = refs[3 + 3 * i][...]                       # (Cout, 1)

        # Conv1d(kernel_size=1) == per-position channel matmul on the MXU; M stays in lanes.
        if matmul_dtype is not None:
            y = jnp.dot(w.astype(matmul_dtype), act.astype(matmul_dtype),
                        preferred_element_type=jnp.float32)
        else:
            y = jnp.dot(w, act, preferred_element_type=jnp.float32)   # (Cout, M)

        # Training-mode BatchNorm1d statistics (biased variance over N*L), single sweep.
        s = jnp.sum(y, axis=-1, keepdims=True)            # (Cout, 1)
        ss = jnp.sum(y * y, axis=-1, keepdims=True)       # (Cout, 1)
        mean = s * inv_m
        var = jnp.maximum(ss * inv_m - mean * mean, 0.0)  # clamp rounding-induced negatives

        # Fold normalize + affine into per-channel scale/shift (tiny (Cout,1) math, EUP rsqrt).
        scale = gamma * jax.lax.rsqrt(var + eps)
        shift = beta - mean * scale
        y = y * scale + shift                             # 2 full-slab VPU passes

        if i != n_layers - 1:
            y = jnp.maximum(y, 0.0)                       # ReLU

        act = y

    o_ref[...] = act


def init_base_learner_params(key, in_channels, params):
    """Deterministic parameter init mirroring the module's __init__ shapes.

    Conv1d(in_dim, out_dim, 1): weight (out_dim, in_dim, 1) -> stored (out_dim, in_dim),
    bias (out_dim,) -> (out_dim, 1).  BatchNorm1d(out_dim): gamma=1, beta=0 (PyTorch defaults).
    """
    layers = []
    for i, out_dim in enumerate(params):
        in_dim = in_channels if i == 0 else params[i - 1]
        key, kw, kb = jax.random.split(key, 3)
        bound = 1.0 / jnp.sqrt(jnp.float32(in_dim))       # PyTorch conv default (fan_in = in_dim * 1)
        w = jax.random.uniform(kw, (out_dim, in_dim), jnp.float32, -bound, bound)
        b = jax.random.uniform(kb, (out_dim, 1), jnp.float32, -bound, bound)
        gamma = jnp.ones((out_dim, 1), jnp.float32)
        beta = jnp.zeros((out_dim, 1), jnp.float32)
        layers.append((w, b, gamma, beta))
    return layers


def base_learner_forward(x_ncl, layers, eps=1e-5, matmul_dtype=None):
    """x_ncl: (N, C_in, L) f32 -> (N, C_out, L) f32, training-mode BatchNorm semantics.

    matmul_dtype: optional (e.g. jnp.bfloat16) cast at the MXU only (BN math stays f32);
    leave None for closest-to-PyTorch numerics.
    """
    n, c_in, l = x_ncl.shape
    m = n * l

    # Boundary layout change only (no pad, no post-slice): (N, C, L) -> (C, N*L).
    x_cm = jnp.transpose(x_ncl, (1, 0, 2)).reshape(c_in, m)

    n_layers = len(layers)
    c_out = layers[-1][0].shape[0]
    max_c = max([c_in] + [w.shape[0] for (w, _, _, _) in layers])

    # Conv bias is intentionally NOT passed to the kernel: followed by training-mode BN it
    # cancels exactly, so the full-slab add is pure wasted VALU work.
    flat_params = []
    for (w, _b, gamma, beta) in layers:
        flat_params.extend([w, gamma, beta])

    # VMEM working set: input + output slabs + ~3 live (max_C, M) intermediates + params.
    est_bytes = 4 * m * (c_in + c_out + 3 * max_c) + sum(4 * p.size for p in flat_params)
    compiler_params = None
    if est_bytes > 16 * 1024 * 1024:                      # beyond the default scoped VMEM limit
        try:
            vmem_cap = pltpu.get_tpu_info().vmem_capacity_bytes
        except Exception:
            vmem_cap = 64 * 1024 * 1024                   # conservative (v7x-sized) fallback
        compiler_params = pltpu.CompilerParams(
            vmem_limit_bytes=int(min(1.2 * est_bytes, vmem_cap - 4 * 1024 * 1024))
        )

    kernel = functools.partial(
        _fused_base_learner_kernel,
        n_layers=n_layers, inv_m=1.0 / m, eps=eps, matmul_dtype=matmul_dtype,
    )

    out_cm = pl.pallas_call(
        kernel,
        out_shape=jax.ShapeDtypeStruct((c_out, m), jnp.float32),
        in_specs=[pl.BlockSpec(memory_space=pltpu.MemorySpace.VMEM)] * (1 + 3 * n_layers),
        out_specs=pl.BlockSpec(memory_space=pltpu.MemorySpace.VMEM),
        compiler_params=compiler_params,
    )(x_cm, *flat_params)

    # (C_out, N*L) -> (N, C_out, L)
    return jnp.transpose(out_cm.reshape(c_out, n, l), (1, 0, 2))


if __name__ == "__main__":
    key = jax.random.PRNGKey(0)
    key, kx = jax.random.split(key)

    # Small shapes consistent with the module: batch=2, in_channels=4, length=16.
    N, C_IN, L = 2, 4, 16
    PARAMS = (32, 32, 16)  # hidden conv widths of BaseLearner

    x = jax.random.normal(kx, (N, C_IN, L), dtype=jnp.float32)
    layers = init_base_learner_params(key, C_IN, PARAMS)

    out = base_learner_forward(x, layers)
    out = jax.block_until_ready(out)

    assert out.shape == (N, PARAMS[-1], L), out.shape
    assert out.dtype == jnp.float32
    assert bool(jnp.all(jnp.isfinite(out)))
    print("KERNEL_OK")
</pallas_src>

<mosaic_0001>
module attributes {stable_mosaic.version = 11 : i64} {
  func.func @_fused_base_learner_kernel(%arg0: memref<4x32xf32, #tpu.memory_space<vmem>>, %arg1: memref<32x4xf32, #tpu.memory_space<vmem>>, %arg2: memref<32x1xf32, #tpu.memory_space<vmem>>, %arg3: memref<32x1xf32, #tpu.memory_space<vmem>>, %arg4: memref<32x32xf32, #tpu.memory_space<vmem>>, %arg5: memref<32x1xf32, #tpu.memory_space<vmem>>, %arg6: memref<32x1xf32, #tpu.memory_space<vmem>>, %arg7: memref<16x32xf32, #tpu.memory_space<vmem>>, %arg8: memref<16x1xf32, #tpu.memory_space<vmem>>, %arg9: memref<16x1xf32, #tpu.memory_space<vmem>>, %arg10: memref<16x32xf32, #tpu.memory_space<vmem>>) attributes {dimension_semantics = [], scalar_prefetch = 0 : i64, scratch_operands = 0 : i64, tpu.core_type = #tpu.core_type<tc>} {
    %c0 = arith.constant 0 : index
    %c0_0 = arith.constant 0 : index
    %0 = vector.load %arg0[%c0, %c0_0] : memref<4x32xf32, #tpu.memory_space<vmem>>, vector<4x32xf32>
    %c0_1 = arith.constant 0 : index
    %c0_2 = arith.constant 0 : index
    %1 = vector.load %arg1[%c0_1, %c0_2] : memref<32x4xf32, #tpu.memory_space<vmem>>, vector<32x4xf32>
    %c0_3 = arith.constant 0 : index
    %c0_4 = arith.constant 0 : index
    %2 = vector.load %arg2[%c0_3, %c0_4] : memref<32x1xf32, #tpu.memory_space<vmem>>, vector<32x1xf32>
    %c0_5 = arith.constant 0 : index
    %c0_6 = arith.constant 0 : index
    %3 = vector.load %arg3[%c0_5, %c0_6] : memref<32x1xf32, #tpu.memory_space<vmem>>, vector<32x1xf32>
    %cst = arith.constant dense<0.000000e+00> : vector<32x32xf32>
    %4 = tpu.matmul %1, %0, %cst {dimension_numbers = #tpu.dot_dimension_numbers<[1], [0], [0], [1], [0, 0, 1, 1], [], []>} : vector<32x4xf32>, vector<4x32xf32>, vector<32x32xf32> -> vector<32x32xf32>
    %cst_7 = arith.constant dense<0.000000e+00> : vector<32xf32>
    %5 = vector.multi_reduction <add>, %4, %cst_7 [1] : vector<32x32xf32> to vector<32xf32>
    %6 = vector.shape_cast %5 : vector<32xf32> to vector<32x1xf32>
    %7 = arith.mulf %4, %4 : vector<32x32xf32>
    %cst_8 = arith.constant dense<0.000000e+00> : vector<32xf32>
    %8 = vector.multi_reduction <add>, %7, %cst_8 [1] : vector<32x32xf32> to vector<32xf32>
    %9 = vector.shape_cast %8 : vector<32xf32> to vector<32x1xf32>
    %cst_9 = arith.constant 3.125000e-02 : f32
    %10 = vector.broadcast %cst_9 : f32 to vector<32x1xf32>
    %11 = arith.mulf %6, %10 : vector<32x1xf32>
    %cst_10 = arith.constant 3.125000e-02 : f32
    %12 = vector.broadcast %cst_10 : f32 to vector<32x1xf32>
    %13 = arith.mulf %9, %12 : vector<32x1xf32>
    %14 = arith.mulf %11, %11 : vector<32x1xf32>
    %15 = arith.subf %13, %14 : vector<32x1xf32>
    %cst_11 = arith.constant 0.000000e+00 : f32
    %16 = vector.broadcast %cst_11 : f32 to vector<32x1xf32>
    %17 = arith.maximumf %15, %16 : vector<32x1xf32>
    %cst_12 = arith.constant 9.99999974E-6 : f32
    %18 = vector.broadcast %cst_12 : f32 to vector<32x1xf32>
    %19 = arith.addf %17, %18 : vector<32x1xf32>
    %20 = math.rsqrt %19 : vector<32x1xf32>
    %21 = arith.mulf %2, %20 : vector<32x1xf32>
    %22 = arith.mulf %11, %21 : vector<32x1xf32>
    %23 = arith.subf %3, %22 : vector<32x1xf32>
    %24 = vector.broadcast %21 : vector<32x1xf32> to vector<32x32xf32>
    %25 = arith.mulf %4, %24 : vector<32x32xf32>
    %26 = vector.broadcast %23 : vector<32x1xf32> to vector<32x32xf32>
    %27 = arith.addf %25, %26 : vector<32x32xf32>
    %cst_13 = arith.constant 0.000000e+00 : f32
    %28 = vector.broadcast %cst_13 : f32 to vector<32x32xf32>
    %29 = arith.maximumf %27, %28 : vector<32x32xf32>
    %c0_14 = arith.constant 0 : index
    %c0_15 = arith.constant 0 : index
    %30 = vector.load %arg4[%c0_14, %c0_15] : memref<32x32xf32, #tpu.memory_space<vmem>>, vector<32x32xf32>
    %c0_16 = arith.constant 0 : index
    %c0_17 = arith.constant 0 : index
    %31 = vector.load %arg5[%c0_16, %c0_17] : memref<32x1xf32, #tpu.memory_space<vmem>>, vector<32x1xf32>
    %c0_18 = arith.constant 0 : index
    %c0_19 = arith.constant 0 : index
    %32 = vector.load %arg6[%c0_18, %c0_19] : memref<32x1xf32, #tpu.memory_space<vmem>>, vector<32x1xf32>
    %cst_20 = arith.constant dense<0.000000e+00> : vector<32x32xf32>
    %33 = tpu.matmul %30, %29, %cst_20 {dimension_numbers = #tpu.dot_dimension_numbers<[1], [0], [0], [1], [0, 0, 1, 1], [], []>} : vector<32x32xf32>, vector<32x32xf32>, vector<32x32xf32> -> vector<32x32xf32>
    %cst_21 = arith.constant dense<0.000000e+00> : vector<32xf32>
    %34 = vector.multi_reduction <add>, %33, %cst_21 [1] : vector<32x32xf32> to vector<32xf32>
    %35 = vector.shape_cast %34 : vector<32xf32> to vector<32x1xf32>
    %36 = arith.mulf %33, %33 : vector<32x32xf32>
    %cst_22 = arith.constant dense<0.000000e+00> : vector<32xf32>
    %37 = vector.multi_reduction <add>, %36, %cst_22 [1] : vector<32x32xf32> to vector<32xf32>
    %38 = vector.shape_cast %37 : vector<32xf32> to vector<32x1xf32>
    %cst_23 = arith.constant 3.125000e-02 : f32
    %39 = vector.broadcast %cst_23 : f32 to vector<32x1xf32>
    %40 = arith.mulf %35, %39 : vector<32x1xf32>
    %cst_24 = arith.constant 3.125000e-02 : f32
    %41 = vector.broadcast %cst_24 : f32 to vector<32x1xf32>
    %42 = arith.mulf %38, %41 : vector<32x1xf32>
    %43 = arith.mulf %40, %40 : vector<32x1xf32>
    %44 = arith.subf %42, %43 : vector<32x1xf32>
    %cst_25 = arith.constant 0.000000e+00 : f32
    %45 = vector.broadcast %cst_25 : f32 to vector<32x1xf32>
    %46 = arith.maximumf %44, %45 : vector<32x1xf32>
    %cst_26 = arith.constant 9.99999974E-6 : f32
    %47 = vector.broadcast %cst_26 : f32 to vector<32x1xf32>
    %48 = arith.addf %46, %47 : vector<32x1xf32>
    %49 = math.rsqrt %48 : vector<32x1xf32>
    %50 = arith.mulf %31, %49 : vector<32x1xf32>
    %51 = arith.mulf %40, %50 : vector<32x1xf32>
    %52 = arith.subf %32, %51 : vector<32x1xf32>
    %53 = vector.broadcast %50 : vector<32x1xf32> to vector<32x32xf32>
    %54 = arith.mulf %33, %53 : vector<32x32xf32>
    %55 = vector.broadcast %52 : vector<32x1xf32> to vector<32x32xf32>
    %56 = arith.addf %54, %55 : vector<32x32xf32>
    %cst_27 = arith.constant 0.000000e+00 : f32
    %57 = vector.broadcast %cst_27 : f32 to vector<32x32xf32>
    %58 = arith.maximumf %56, %57 : vector<32x32xf32>
    %c0_28 = arith.constant 0 : index
    %c0_29 = arith.constant 0 : index
    %59 = vector.load %arg7[%c0_28, %c0_29] : memref<16x32xf32, #tpu.memory_space<vmem>>, vector<16x32xf32>
    %c0_30 = arith.constant 0 : index
    %c0_31 = arith.constant 0 : index
    %60 = vector.load %arg8[%c0_30, %c0_31] : memref<16x1xf32, #tpu.memory_space<vmem>>, vector<16x1xf32>
    %c0_32 = arith.constant 0 : index
    %c0_33 = arith.constant 0 : index
    %61 = vector.load %arg9[%c0_32, %c0_33] : memref<16x1xf32, #tpu.memory_space<vmem>>, vector<16x1xf32>
    %cst_34 = arith.constant dense<0.000000e+00> : vector<16x32xf32>
    %62 = tpu.matmul %59, %58, %cst_34 {dimension_numbers = #tpu.dot_dimension_numbers<[1], [0], [0], [1], [0, 0, 1, 1], [], []>} : vector<16x32xf32>, vector<32x32xf32>, vector<16x32xf32> -> vector<16x32xf32>
    %cst_35 = arith.constant dense<0.000000e+00> : vector<16xf32>
    %63 = vector.multi_reduction <add>, %62, %cst_35 [1] : vector<16x32xf32> to vector<16xf32>
    %64 = vector.shape_cast %63 : vector<16xf32> to vector<16x1xf32>
    %65 = arith.mulf %62, %62 : vector<16x32xf32>
    %cst_36 = arith.constant dense<0.000000e+00> : vector<16xf32>
    %66 = vector.multi_reduction <add>, %65, %cst_36 [1] : vector<16x32xf32> to vector<16xf32>
    %67 = vector.shape_cast %66 : vector<16xf32> to vector<16x1xf32>
    %cst_37 = arith.constant 3.125000e-02 : f32
    %68 = vector.broadcast %cst_37 : f32 to vector<16x1xf32>
    %69 = arith.mulf %64, %68 : vector<16x1xf32>
    %cst_38 = arith.constant 3.125000e-02 : f32
    %70 = vector.broadcast %cst_38 : f32 to vector<16x1xf32>
    %71 = arith.mulf %67, %70 : vector<16x1xf32>
    %72 = arith.mulf %69, %69 : vector<16x1xf32>
    %73 = arith.subf %71, %72 : vector<16x1xf32>
    %cst_39 = arith.constant 0.000000e+00 : f32
    %74 = vector.broadcast %cst_39 : f32 to vector<16x1xf32>
    %75 = arith.maximumf %73, %74 : vector<16x1xf32>
    %cst_40 = arith.constant 9.99999974E-6 : f32
    %76 = vector.broadcast %cst_40 : f32 to vector<16x1xf32>
    %77 = arith.addf %75, %76 : vector<16x1xf32>
    %78 = math.rsqrt %77 : vector<16x1xf32>
    %79 = arith.mulf %60, %78 : vector<16x1xf32>
    %80 = arith.mulf %69, %79 : vector<16x1xf32>
    %81 = arith.subf %61, %80 : vector<16x1xf32>
    %82 = vector.broadcast %79 : vector<16x1xf32> to vector<16x32xf32>
    %83 = arith.mulf %62, %82 : vector<16x32xf32>
    %84 = vector.broadcast %81 : vector<16x1xf32> to vector<16x32xf32>
    %85 = arith.addf %83, %84 : vector<16x32xf32>
    %c0_41 = arith.constant 0 : index
    %c0_42 = arith.constant 0 : index
    %86 = vector.load %arg10[%c0_41, %c0_42] : memref<16x32xf32, #tpu.memory_space<vmem>>, vector<16x32xf32>
    tpu.vector_store %arg10[%c0_41, %c0_42], %85 {strides = array<i32>} : memref<16x32xf32, #tpu.memory_space<vmem>>, vector<16x32xf32>,
    return
  }
}

</mosaic_0001>

<llo_original>
// kernel: tpu_custom_call.1
$region0: #{tpu_custom_call.1}
  #allocation0 [shape = 'u32[]', space=smem, size = 0x4, offset = 0x4, fixed_abs, tag = 'smem constant byte address 0x4 - core index']
  #allocation1 [shape = 'u32[144,128]{1,0:T(1,128)}', space=vmem, size = 0x12000, scoped, tag = 'internal scratch']
  %s0 = inlined_call_operand.vmem [shape: f32[4,32], index: 0, kind: input, shape index: {}]
  %s1 = inlined_call_operand.vmem [shape: f32[32,4], index: 1, kind: input, shape index: {}]
  %s2 = inlined_call_operand.vmem [shape: f32[32,1], index: 2, kind: input, shape index: {}]
  %s3 = inlined_call_operand.vmem [shape: f32[32,1], index: 3, kind: input, shape index: {}]
  %s4 = inlined_call_operand.vmem [shape: f32[32,32], index: 4, kind: input, shape index: {}]
  %s5 = inlined_call_operand.vmem [shape: f32[32,1], index: 5, kind: input, shape index: {}]
  %s6 = inlined_call_operand.vmem [shape: f32[32,1], index: 6, kind: input, shape index: {}]
  %s7 = inlined_call_operand.vmem [shape: f32[16,32], index: 7, kind: input, shape index: {}]
  %s8 = inlined_call_operand.vmem [shape: f32[16,1], index: 8, kind: input, shape index: {}]
  %s9 = inlined_call_operand.vmem [shape: f32[16,1], index: 9, kind: input, shape index: {}]
  %s10 = inlined_call_operand.hbm [shape: f32[16,32], index: 10, kind: output, shape index: {}]
  %s11 = sld [smem:[#allocation0]]
  $region50: #{tpu_custom_call.1} parent=0
    _
  %s13 = ssub.s32 1, %s11
  %s14 = scalar_select 0, %s13, %s11
  $region1: #{tpu_custom_call.1} parent=0
    #allocation2 [shape = 'u8[8192]{0}', space=vmem, size = 0x2000, scoped, tag = 'output window, operand 0, single buffered']
    #allocation3 [shape = 's32[1]{0}', space=sflag, size = 0x4, scoped, tag = 'scoped memory for tpu_custom_call.1']
    %15 = vsyncpa [#allocation3], 0
    // Predicated region
    $region2: #{tpu_custom_call.1} parent=1 // pred_check
      _
    $region3: #{tpu_custom_call.1} parent=1 // pred_check_branch
      %17 = sbr.rel (0) target = $region5
    $region4: #{tpu_custom_call.1} parent=1 // pred_region
      _
    $region5: #{tpu_custom_call.1} parent=1 // pred_fallthru
      _
    // Predicated region
    $region6: #{tpu_custom_call.1} parent=1 // pred_check
      _
    $region7: #{tpu_custom_call.1} parent=1 // pred_check_branch
      %19 = sbr.rel (0) target = $region9
    $region8: #{tpu_custom_call.1} parent=1 // pred_region
      _
    $region9: #{tpu_custom_call.1} parent=1 // pred_fallthru
      _
    // Predicated region
    $region10: #{tpu_custom_call.1} parent=1 // pred_check
      _
    $region11: #{tpu_custom_call.1} parent=1 // pred_check_branch
      %21 = sbr.rel (0) target = $region13
    $region12: #{tpu_custom_call.1} parent=1 // pred_region
      _
    $region13: #{tpu_custom_call.1} parent=1 // pred_fallthru
      _
    // Predicated region
    $region14: #{tpu_custom_call.1} parent=1 // pred_check
      _
    $region15: #{tpu_custom_call.1} parent=1 // pred_check_branch
      %23 = sbr.rel (0) target = $region17
    $region16: #{tpu_custom_call.1} parent=1 // pred_region
      _
    $region17: #{tpu_custom_call.1} parent=1 // pred_fallthru
      _
    // Predicated region
    $region18: #{tpu_custom_call.1} parent=1 // pred_check
      _
    $region19: #{tpu_custom_call.1} parent=1 // pred_check_branch
      %25 = sbr.rel (0) target = $region21
    $region20: #{tpu_custom_call.1} parent=1 // pred_region
      _
    $region21: #{tpu_custom_call.1} parent=1 // pred_fallthru
      _
    // Predicated region
    $region22: #{tpu_custom_call.1} parent=1 // pred_check
      _
    $region23: #{tpu_custom_call.1} parent=1 // pred_check_branch
      %27 = sbr.rel (0) target = $region25
    $region24: #{tpu_custom_call.1} parent=1 // pred_region
      _
    $region25: #{tpu_custom_call.1} parent=1 // pred_fallthru
      _
    // Predicated region
    $region26: #{tpu_custom_call.1} parent=1 // pred_check
      _
    $region27: #{tpu_custom_call.1} parent=1 // pred_check_branch
      %29 = sbr.rel (0) target = $region29
    $region28: #{tpu_custom_call.1} parent=1 // pred_region
      _
    $region29: #{tpu_custom_call.1} parent=1 // pred_fallthru
      _
    // Predicated region
    $region30: #{tpu_custom_call.1} parent=1 // pred_check
      _
    $region31: #{tpu_custom_call.1} parent=1 // pred_check_branch
      %31 = sbr.rel (0) target = $region33
    $region32: #{tpu_custom_call.1} parent=1 // pred_region
      _
    $region33: #{tpu_custom_call.1} parent=1 // pred_fallthru
      _
    // Predicated region
    $region34: #{tpu_custom_call.1} parent=1 // pred_check
      _
    $region35: #{tpu_custom_call.1} parent=1 // pred_check_branch
      %33 = sbr.rel (0) target = $region37
    $region36: #{tpu_custom_call.1} parent=1 // pred_region
      _
    $region37: #{tpu_custom_call.1} parent=1 // pred_fallthru
      _
    // Predicated region
    $region38: #{tpu_custom_call.1} parent=1 // pred_check
      _
    $region39: #{tpu_custom_call.1} parent=1 // pred_check_branch
      %35 = sbr.rel (0) target = $region41
    $region40: #{tpu_custom_call.1} parent=1 // pred_region
      _
    $region41: #{tpu_custom_call.1} parent=1 // pred_fallthru
      _
    %v36 = vld [vmem:[%s0] sm:$0xf]
    %v37 = vld [vmem:[%s1] sm:$0xff]
    %v38 = vld [vmem:[%s1 + $0x8] sm:$0xff]
    %v39 = vld [vmem:[%s1 + $0x10] sm:$0xff]
    %v40 = vld [vmem:[%s1 + $0x18] sm:$0xff]
    %v41 = vld [vmem:[%s2] sm:$0xff]
    %v42 = vld [vmem:[%s2 + $0x8] sm:$0xff]
    %v43 = vld [vmem:[%s2 + $0x10] sm:$0xff]
    %v44 = vld [vmem:[%s2 + $0x18] sm:$0xff]
    %v45 = vld [vmem:[%s3] sm:$0xff]
    %v46 = vld [vmem:[%s3 + $0x8] sm:$0xff]
    %v47 = vld [vmem:[%s3 + $0x10] sm:$0xff]
    %v48 = vld [vmem:[%s3 + $0x18] sm:$0xff]
    %vm49 = vcmask 31744
    %v51 = vsel %vm49, %v37, 0
    %v54 = vsel %vm49, %v38, 0
    %v57 = vsel %vm49, %v39, 0
    %v60 = vsel %vm49, %v40, 0
    %vm62 = vcmask 1043456
    %v64 = vsel %vm62, %v36, 0
    %66 = vmatprep.subr.mxu0 0.0
    %67 = vmatpush1.msra.mxu0 %v64
    %68 = vmatprep.subr.mxu0 0.0
    %69 = vmatpush1.msra.mxu0 0.0
    %70 = vmatprep.subr.mxu0 0.0
    %71 = vmatpush1.msra.mxu0 0.0
    %72 = vmatprep.subr.mxu0 0.0
    %73 = vmatpush1.msra.mxu0 0.0
    %74 = vmatprep.subr.mxu0 0.0
    %75 = vmatpush1.msra.mxu0 0.0
    %76 = vmatprep.subr.mxu0 0.0
    %77 = vmatpush1.msra.mxu0 0.0
    %78 = vmatprep.subr.mxu0 0.0
    %79 = vmatpush1.msra.mxu0 0.0
    %80 = vmatprep.subr.mxu0 0.0
    %81 = vmatpush1.msra.mxu0 0.0
    %82 = vmatprep.subr.mxu0 0.0
    %83 = vmatpush1.msra.mxu0 0.0
    %84 = vmatprep.subr.mxu0 0.0
    %85 = vmatpush1.msra.mxu0 0.0
    %86 = vmatprep.subr.mxu0 0.0
    %87 = vmatpush1.msra.mxu0 0.0
    %88 = vmatprep.subr.mxu0 0.0
    %89 = vmatpush1.msra.mxu0 0.0
    %90 = vmatprep.subr.mxu0 0.0
    %91 = vmatpush1.msra.mxu0 0.0
    %92 = vmatprep.subr.mxu0 0.0
    %93 = vmatpush1.msra.mxu0 0.0
    %94 = vmatprep.subr.mxu0 0.0
    %95 = vmatpush1.msra.mxu0 0.0
    %96 = vmatprep.subr.mxu0 0.0
    %97 = vmatpush1.msra.mxu0 0.0
    %98 = vmatprep.subr.mxu0 0.0
    %99 = vmatpush1.msra.mxu0 0.0
    %100 = vmatprep.subr.mxu0 0.0
    %101 = vmatpush1.msra.mxu0 0.0
    %102 = vmatprep.subr.mxu0 0.0
    %103 = vmatpush1.msra.mxu0 0.0
    %104 = vmatprep.subr.mxu0 0.0
    %105 = vmatpush1.msra.mxu0 0.0
    %106 = vmatprep.subr.mxu0 0.0
    %107 = vmatpush1.msra.mxu0 0.0
    %108 = vmatprep.subr.mxu0 0.0
    %109 = vmatpush1.msra.mxu0 0.0
    %110 = vmatprep.subr.mxu0 0.0
    %111 = vmatpush1.msra.mxu0 0.0
    %112 = vmatprep.subr.mxu0 0.0
    %113 = vmatpush1.msra.mxu0 0.0
    %114 = vmatprep.subr.mxu0 0.0
    %115 = vmatpush1.msra.mxu0 0.0
    %116 = vmatprep.subr.mxu0 0.0
    %117 = vmatpush1.msra.mxu0 0.0
    %118 = vmatprep.subr.mxu0 0.0
    %119 = vmatpush1.msra.mxu0 0.0
    %120 = vmatprep.subr.mxu0 0.0
    %121 = vmatpush1.msra.mxu0 0.0
    %122 = vmatprep.subr.mxu0 0.0
    %123 = vmatpush1.msra.mxu0 0.0
    %124 = vmatprep.subr.mxu0 0.0
    %125 = vmatpush1.msra.mxu0 0.0
    %126 = vmatprep.subr.mxu0 0.0
    %127 = vmatpush1.msra.mxu0 0.0
    %128 = vmatprep.subr.mxu0 0.0
    %129 = vmatpush1.msra.mxu0 0.0
    %130 = vmatprep.mubr.f32.mxu0 0.0
    %131 = vmatmul.mubr.f32.gmra.mrb[0].mxu0 %v51
    %v132 = vpop.f32.mrb[0].mxu0
    %v133 = vadd.f32 0.0, %v132
    %v134 = vpop.f32.mrb[0].mxu0
    %135 = vmatprep.mubr.f32.mxu0 0.0
    %136 = vmatmul.mubr.f32.gmra.mrb[0].mxu0 %v54
    %v137 = vpop.f32.mrb[0].mxu0
    %v138 = vadd.f32 0.0, %v137
    %v139 = vpop.f32.mrb[0].mxu0
    %140 = vmatprep.mubr.f32.mxu0 0.0
    %141 = vmatmul.mubr.f32.gmra.mrb[0].mxu0 %v57
    %v142 = vpop.f32.mrb[0].mxu0
    %v143 = vadd.f32 0.0, %v142
    %v144 = vpop.f32.mrb[0].mxu0
    %145 = vmatprep.mubr.f32.mxu0 0.0
    %146 = vmatmul.mubr.f32.gmra.mrb[0].mxu0 %v60
    %v147 = vpop.f32.mrb[0].mxu0
    %v148 = vadd.f32 0.0, %v147
    %v149 = vpop.f32.mrb[0].mxu0
    %150 = vdwg.mxu0
    %vm151 = vcmask 261120
    %v152 = vsel %vm151, %v133, 0.0
    %153 = vadd.xlane.f32.xlu0 %v152
    %v154 = vpop.xlane.xlu0 %153
    %v155 = vsel %vm151, %v138, 0.0
    %156 = vadd.xlane.f32.xlu0 %v155
    %v157 = vpop.xlane.xlu0 %156
    %v158 = vsel %vm151, %v143, 0.0
    %159 = vadd.xlane.f32.xlu0 %v158
    %v160 = vpop.xlane.xlu0 %159
    %v161 = vsel %vm151, %v148, 0.0
    %162 = vadd.xlane.f32.xlu0 %v161
    %v163 = vpop.xlane.xlu0 %162
    %v164 = vmul.f32 %v133, %v133
    %v165 = vmul.f32 %v138, %v138
    %v166 = vmul.f32 %v143, %v143
    %v167 = vmul.f32 %v148, %v148
    %v168 = vsel %vm151, %v164, 0.0
    %169 = vadd.xlane.f32.xlu0 %v168
    %v170 = vpop.xlane.xlu0 %169
    %v171 = vsel %vm151, %v165, 0.0
    %172 = vadd.xlane.f32.xlu0 %v171
    %v173 = vpop.xlane.xlu0 %172
    %v174 = vsel %vm151, %v166, 0.0
    %175 = vadd.xlane.f32.xlu0 %v174
    %v176 = vpop.xlane.xlu0 %175
    %v177 = vsel %vm151, %v167, 0.0
    %178 = vadd.xlane.f32.xlu0 %v177
    %v179 = vpop.xlane.xlu0 %178
    %v180 = vmul.f32 %v154, 0.03125
    %v181 = vmul.f32 %v157, 0.03125
    %v182 = vmul.f32 %v160, 0.03125
    %v183 = vmul.f32 %v163, 0.03125
    %v184 = vmul.f32 %v170, 0.03125
    %v185 = vmul.f32 %v173, 0.03125
    %v186 = vmul.f32 %v176, 0.03125
    %v187 = vmul.f32 %v179, 0.03125
    %v188 = vmul.f32 %v180, %v180
    %v189 = vmul.f32 %v181, %v181
    %v190 = vmul.f32 %v182, %v182
    %v191 = vmul.f32 %v183, %v183
    %v192 = vsub.f32 %v184, %v188
    %v193 = vsub.f32 %v185, %v189
    %v194 = vsub.f32 %v186, %v190
    %v195 = vsub.f32 %v187, %v191
    %v196 = vmax.f32 %v192, 0.0
    %v197 = vmax.f32 %v193, 0.0
    %v198 = vmax.f32 %v194, 0.0
    %v199 = vmax.f32 %v195, 0.0
    %v200 = vadd.f32 %v196, 1e-05
    %v201 = vadd.f32 %v197, 1e-05
    %v202 = vadd.f32 %v198, 1e-05
    %v203 = vadd.f32 %v199, 1e-05
    %v204 = vrsqrt.pop %v200
    %v205 = vrsqrt.pop %v201
    %v206 = vrsqrt.pop %v202
    %v207 = vrsqrt.pop %v203
    %v208 = vmul.f32 %v41, %v204
    %v209 = vmul.f32 %v42, %v205
    %v210 = vmul.f32 %v43, %v206
    %v211 = vmul.f32 %v44, %v207
    %v212 = vmul.f32 %v180, %v208
    %v213 = vmul.f32 %v181, %v209
    %v214 = vmul.f32 %v182, %v210
    %v215 = vmul.f32 %v183, %v211
    %v216 = vsub.f32 %v45, %v212
    %v217 = vsub.f32 %v46, %v213
    %v218 = vsub.f32 %v47, %v214
    %v219 = vsub.f32 %v48, %v215
    %221 = vset.pattern.permute.xlu0 0
    %222 = vperm.xlu0 %221, %v208
    %v223 = vpop.permute.xlu0 %222
    %226 = vset.pattern.permute.xlu0 0
    %227 = vperm.xlu0 %226, %v209
    %v228 = vpop.permute.xlu0 %227
    %231 = vset.pattern.permute.xlu0 0
    %232 = vperm.xlu0 %231, %v210
    %v233 = vpop.permute.xlu0 %232
    %236 = vset.pattern.permute.xlu0 0
    %237 = vperm.xlu0 %236, %v211
    %v238 = vpop.permute.xlu0 %237
    %v240 = vmul.f32 %v133, %v223
    %v241 = vmul.f32 %v138, %v228
    %v242 = vmul.f32 %v143, %v233
    %v243 = vmul.f32 %v148, %v238
    %245 = vset.pattern.permute.xlu0 0
    %246 = vperm.xlu0 %245, %v216
    %v247 = vpop.permute.xlu0 %246
    %250 = vset.pattern.permute.xlu0 0
    %251 = vperm.xlu0 %250, %v217
    %v252 = vpop.permute.xlu0 %251
    %255 = vset.pattern.permute.xlu0 0
    %256 = vperm.xlu0 %255, %v218
    %v257 = vpop.permute.xlu0 %256
    %260 = vset.pattern.permute.xlu0 0
    %261 = vperm.xlu0 %260, %v219
    %v262 = vpop.permute.xlu0 %261
    %v264 = vadd.f32 %v240, %v247
    %v265 = vadd.f32 %v241, %v252
    %v266 = vadd.f32 %v242, %v257
    %v267 = vadd.f32 %v243, %v262
    %v268 = vmax.f32 %v264, 0.0
    %v269 = vmax.f32 %v265, 0.0
    %v270 = vmax.f32 %v266, 0.0
    %v271 = vmax.f32 %v267, 0.0
    %v272 = vld [vmem:[%s4] sm:$0xff]
    %v273 = vld [vmem:[%s4 + $0x8] sm:$0xff]
    %v274 = vld [vmem:[%s4 + $0x10] sm:$0xff]
    %v275 = vld [vmem:[%s4 + $0x18] sm:$0xff]
    %v276 = vld [vmem:[%s5] sm:$0xff]
    %v277 = vld [vmem:[%s5 + $0x8] sm:$0xff]
    %v278 = vld [vmem:[%s5 + $0x10] sm:$0xff]
    %v279 = vld [vmem:[%s5 + $0x18] sm:$0xff]
    %v280 = vld [vmem:[%s6] sm:$0xff]
    %v281 = vld [vmem:[%s6 + $0x8] sm:$0xff]
    %v282 = vld [vmem:[%s6 + $0x10] sm:$0xff]
    %v283 = vld [vmem:[%s6 + $0x18] sm:$0xff]
    %v285 = vsel %vm151, %v272, 0
    %v288 = vsel %vm151, %v273, 0
    %v291 = vsel %vm151, %v274, 0
    %v294 = vsel %vm151, %v275, 0
    %296 = vmatprep.subr.mxu0 0.0
    %297 = vmatpush1.msra.mxu0 %v268
    %298 = vmatprep.subr.mxu0 0.0
    %299 = vmatpush1.msra.mxu0 %v269
    %300 = vmatprep.subr.mxu0 0.0
    %301 = vmatpush1.msra.mxu0 %v270
    %302 = vmatprep.subr.mxu0 0.0
    %303 = vmatpush1.msra.mxu0 %v271
    %304 = vmatprep.subr.mxu0 0.0
    %305 = vmatpush1.msra.mxu0 0.0
    %306 = vmatprep.subr.mxu0 0.0
    %307 = vmatpush1.msra.mxu0 0.0
    %308 = vmatprep.subr.mxu0 0.0
    %309 = vmatpush1.msra.mxu0 0.0
    %310 = vmatprep.subr.mxu0 0.0
    %311 = vmatpush1.msra.mxu0 0.0
    %312 = vmatprep.subr.mxu0 0.0
    %313 = vmatpush1.msra.mxu0 0.0
    %314 = vmatprep.subr.mxu0 0.0
    %315 = vmatpush1.msra.mxu0 0.0
    %316 = vmatprep.subr.mxu0 0.0
    %317 = vmatpush1.msra.mxu0 0.0
    %318 = vmatprep.subr.mxu0 0.0
    %319 = vmatpush1.msra.mxu0 0.0
    %320 = vmatprep.subr.mxu0 0.0
    %321 = vmatpush1.msra.mxu0 0.0
    %322 = vmatprep.subr.mxu0 0.0
    %323 = vmatpush1.msra.mxu0 0.0
    %324 = vmatprep.subr.mxu0 0.0
    %325 = vmatpush1.msra.mxu0 0.0
    %326 = vmatprep.subr.mxu0 0.0
    %327 = vmatpush1.msra.mxu0 0.0
    %328 = vmatprep.subr.mxu0 0.0
    %329 = vmatpush1.msra.mxu0 0.0
    %330 = vmatprep.subr.mxu0 0.0
    %331 = vmatpush1.msra.mxu0 0.0
    %332 = vmatprep.subr.mxu0 0.0
    %333 = vmatpush1.msra.mxu0 0.0
    %334 = vmatprep.subr.mxu0 0.0
    %335 = vmatpush1.msra.mxu0 0.0
    %336 = vmatprep.subr.mxu0 0.0
    %337 = vmatpush1.msra.mxu0 0.0
    %338 = vmatprep.subr.mxu0 0.0
    %339 = vmatpush1.msra.mxu0 0.0
    %340 = vmatprep.subr.mxu0 0.0
    %341 = vmatpush1.msra.mxu0 0.0
    %342 = vmatprep.subr.mxu0 0.0
    %343 = vmatpush1.msra.mxu0 0.0
    %344 = vmatprep.subr.mxu0 0.0
    %345 = vmatpush1.msra.mxu0 0.0
    %346 = vmatprep.subr.mxu0 0.0
    %347 = vmatpush1.msra.mxu0 0.0
    %348 = vmatprep.subr.mxu0 0.0
    %349 = vmatpush1.msra.mxu0 0.0
    %350 = vmatprep.subr.mxu0 0.0
    %351 = vmatpush1.msra.mxu0 0.0
    %352 = vmatprep.subr.mxu0 0.0
    %353 = vmatpush1.msra.mxu0 0.0
    %354 = vmatprep.subr.mxu0 0.0
    %355 = vmatpush1.msra.mxu0 0.0
    %356 = vmatprep.subr.mxu0 0.0
    %357 = vmatpush1.msra.mxu0 0.0
    %358 = vmatprep.subr.mxu0 0.0
    %359 = vmatpush1.msra.mxu0 0.0
    %360 = vmatprep.mubr.f32.mxu0 0.0
    %361 = vmatmul.mubr.f32.gmra.mrb[0].mxu0 %v285
    %v362 = vpop.f32.mrb[0].mxu0
    %v363 = vadd.f32 0.0, %v362
    %v364 = vpop.f32.mrb[0].mxu0
    %365 = vmatprep.mubr.f32.mxu0 0.0
    %366 = vmatmul.mubr.f32.gmra.mrb[0].mxu0 %v288
    %v367 = vpop.f32.mrb[0].mxu0
    %v368 = vadd.f32 0.0, %v367
    %v369 = vpop.f32.mrb[0].mxu0
    %370 = vmatprep.mubr.f32.mxu0 0.0
    %371 = vmatmul.mubr.f32.gmra.mrb[0].mxu0 %v291
    %v372 = vpop.f32.mrb[0].mxu0
    %v373 = vadd.f32 0.0, %v372
    %v374 = vpop.f32.mrb[0].mxu0
    %375 = vmatprep.mubr.f32.mxu0 0.0
    %376 = vmatmul.mubr.f32.gmra.mrb[0].mxu0 %v294
    %v377 = vpop.f32.mrb[0].mxu0
    %v378 = vadd.f32 0.0, %v377
    %v379 = vpop.f32.mrb[0].mxu0
    %380 = vdwg.mxu0
    %v381 = vsel %vm151, %v363, 0.0
    %382 = vadd.xlane.f32.xlu0 %v381
    %v383 = vpop.xlane.xlu0 %382
    %v384 = vsel %vm151, %v368, 0.0
    %385 = vadd.xlane.f32.xlu0 %v384
    %v386 = vpop.xlane.xlu0 %385
    %v387 = vsel %vm151, %v373, 0.0
    %388 = vadd.xlane.f32.xlu0 %v387
    %v389 = vpop.xlane.xlu0 %388
    %v390 = vsel %vm151, %v378, 0.0
    %391 = vadd.xlane.f32.xlu0 %v390
    %v392 = vpop.xlane.xlu0 %391
    %v393 = vmul.f32 %v363, %v363
    %v394 = vmul.f32 %v368, %v368
    %v395 = vmul.f32 %v373, %v373
    %v396 = vmul.f32 %v378, %v378
    %v397 = vsel %vm151, %v393, 0.0
    %398 = vadd.xlane.f32.xlu0 %v397
    %v399 = vpop.xlane.xlu0 %398
    %v400 = vsel %vm151, %v394, 0.0
    %401 = vadd.xlane.f32.xlu0 %v400
    %v402 = vpop.xlane.xlu0 %401
    %v403 = vsel %vm151, %v395, 0.0
    %404 = vadd.xlane.f32.xlu0 %v403
    %v405 = vpop.xlane.xlu0 %404
    %v406 = vsel %vm151, %v396, 0.0
    %407 = vadd.xlane.f32.xlu0 %v406
    %v408 = vpop.xlane.xlu0 %407
    %v409 = vmul.f32 %v383, 0.03125
    %v410 = vmul.f32 %v386, 0.03125
    %v411 = vmul.f32 %v389, 0.03125
    %v412 = vmul.f32 %v392, 0.03125
    %v413 = vmul.f32 %v399, 0.03125
    %v414 = vmul.f32 %v402, 0.03125
    %v415 = vmul.f32 %v405, 0.03125
    %v416 = vmul.f32 %v408, 0.03125
    %v417 = vmul.f32 %v409, %v409
    %v418 = vmul.f32 %v410, %v410
    %v419 = vmul.f32 %v411, %v411
    %v420 = vmul.f32 %v412, %v412
    %v421 = vsub.f32 %v413, %v417
    %v422 = vsub.f32 %v414, %v418
    %v423 = vsub.f32 %v415, %v419
    %v424 = vsub.f32 %v416, %v420
    %v425 = vmax.f32 %v421, 0.0
    %v426 = vmax.f32 %v422, 0.0
    %v427 = vmax.f32 %v423, 0.0
    %v428 = vmax.f32 %v424, 0.0
    %v429 = vadd.f32 %v425, 1e-05
    %v430 = vadd.f32 %v426, 1e-05
    %v431 = vadd.f32 %v427, 1e-05
    %v432 = vadd.f32 %v428, 1e-05
    %v433 = vrsqrt.pop %v429
    %v434 = vrsqrt.pop %v430
    %v435 = vrsqrt.pop %v431
    %v436 = vrsqrt.pop %v432
    %v437 = vmul.f32 %v276, %v433
    %v438 = vmul.f32 %v277, %v434
    %v439 = vmul.f32 %v278, %v435
    %v440 = vmul.f32 %v279, %v436
    %v441 = vmul.f32 %v409, %v437
    %v442 = vmul.f32 %v410, %v438
    %v443 = vmul.f32 %v411, %v439
    %v444 = vmul.f32 %v412, %v440
    %v445 = vsub.f32 %v280, %v441
    %v446 = vsub.f32 %v281, %v442
    %v447 = vsub.f32 %v282, %v443
    %v448 = vsub.f32 %v283, %v444
    %450 = vset.pattern.permute.xlu0 0
    %451 = vperm.xlu0 %450, %v437
    %v452 = vpop.permute.xlu0 %451
    %455 = vset.pattern.permute.xlu0 0
    %456 = vperm.xlu0 %455, %v438
    %v457 = vpop.permute.xlu0 %456
    %460 = vset.pattern.permute.xlu0 0
    %461 = vperm.xlu0 %460, %v439
    %v462 = vpop.permute.xlu0 %461
    %465 = vset.pattern.permute.xlu0 0
    %466 = vperm.xlu0 %465, %v440
    %v467 = vpop.permute.xlu0 %466
    %v469 = vmul.f32 %v363, %v452
    %v470 = vmul.f32 %v368, %v457
    %v471 = vmul.f32 %v373, %v462
    %v472 = vmul.f32 %v378, %v467
    %474 = vset.pattern.permute.xlu0 0
    %475 = vperm.xlu0 %474, %v445
    %v476 = vpop.permute.xlu0 %475
    %479 = vset.pattern.permute.xlu0 0
    %480 = vperm.xlu0 %479, %v446
    %v481 = vpop.permute.xlu0 %480
    %484 = vset.pattern.permute.xlu0 0
    %485 = vperm.xlu0 %484, %v447
    %v486 = vpop.permute.xlu0 %485
    %489 = vset.pattern.permute.xlu0 0
    %490 = vperm.xlu0 %489, %v448
    %v491 = vpop.permute.xlu0 %490
    %v493 = vadd.f32 %v469, %v476
    %v494 = vadd.f32 %v470, %v481
    %v495 = vadd.f32 %v471, %v486
    %v496 = vadd.f32 %v472, %v491
    %v497 = vmax.f32 %v493, 0.0
    %v498 = vmax.f32 %v494, 0.0
    %v499 = vmax.f32 %v495, 0.0
    %v500 = vmax.f32 %v496, 0.0
    %v501 = vld [vmem:[%s7] sm:$0xff]
    %v502 = vld [vmem:[%s7 + $0x8] sm:$0xff]
    %v503 = vld [vmem:[%s8] sm:$0xff]
    %v504 = vld [vmem:[%s8 + $0x8] sm:$0xff]
    %v505 = vld [vmem:[%s9] sm:$0xff]
    %v506 = vld [vmem:[%s9 + $0x8] sm:$0xff]
    %v508 = vsel %vm151, %v501, 0
    %v511 = vsel %vm151, %v502, 0
    %513 = vmatprep.subr.mxu0 0.0
    %514 = vmatpush1.msra.mxu0 %v497
    %515 = vmatprep.subr.mxu0 0.0
    %516 = vmatpush1.msra.mxu0 %v498
    %517 = vmatprep.subr.mxu0 0.0
    %518 = vmatpush1.msra.mxu0 %v499
    %519 = vmatprep.subr.mxu0 0.0
    %520 = vmatpush1.msra.mxu0 %v500
    %521 = vmatprep.subr.mxu0 0.0
    %522 = vmatpush1.msra.mxu0 0.0
    %523 = vmatprep.subr.mxu0 0.0
    %524 = vmatpush1.msra.mxu0 0.0
    %525 = vmatprep.subr.mxu0 0.0
    %526 = vmatpush1.msra.mxu0 0.0
    %527 = vmatprep.subr.mxu0 0.0
    %528 = vmatpush1.msra.mxu0 0.0
    %529 = vmatprep.subr.mxu0 0.0
    %530 = vmatpush1.msra.mxu0 0.0
    %531 = vmatprep.subr.mxu0 0.0
    %532 = vmatpush1.msra.mxu0 0.0
    %533 = vmatprep.subr.mxu0 0.0
    %534 = vmatpush1.msra.mxu0 0.0
    %535 = vmatprep.subr.mxu0 0.0
    %536 = vmatpush1.msra.mxu0 0.0
    %537 = vmatprep.subr.mxu0 0.0
    %538 = vmatpush1.msra.mxu0 0.0
    %539 = vmatprep.subr.mxu0 0.0
    %540 = vmatpush1.msra.mxu0 0.0
    %541 = vmatprep.subr.mxu0 0.0
    %542 = vmatpush1.msra.mxu0 0.0
    %543 = vmatprep.subr.mxu0 0.0
    %544 = vmatpush1.msra.mxu0 0.0
    %545 = vmatprep.subr.mxu0 0.0
    %546 = vmatpush1.msra.mxu0 0.0
    %547 = vmatprep.subr.mxu0 0.0
    %548 = vmatpush1.msra.mxu0 0.0
    %549 = vmatprep.subr.mxu0 0.0
    %550 = vmatpush1.msra.mxu0 0.0
    %551 = vmatprep.subr.mxu0 0.0
    %552 = vmatpush1.msra.mxu0 0.0
    %553 = vmatprep.subr.mxu0 0.0
    %554 = vmatpush1.msra.mxu0 0.0
    %555 = vmatprep.subr.mxu0 0.0
    %556 = vmatpush1.msra.mxu0 0.0
    %557 = vmatprep.subr.mxu0 0.0
    %558 = vmatpush1.msra.mxu0 0.0
    %559 = vmatprep.subr.mxu0 0.0
    %560 = vmatpush1.msra.mxu0 0.0
    %561 = vmatprep.subr.mxu0 0.0
    %562 = vmatpush1.msra.mxu0 0.0
    %563 = vmatprep.subr.mxu0 0.0
    %564 = vmatpush1.msra.mxu0 0.0
    %565 = vmatprep.subr.mxu0 0.0
    %566 = vmatpush1.msra.mxu0 0.0
    %567 = vmatprep.subr.mxu0 0.0
    %568 = vmatpush1.msra.mxu0 0.0
    %569 = vmatprep.subr.mxu0 0.0
    %570 = vmatpush1.msra.mxu0 0.0
    %571 = vmatprep.subr.mxu0 0.0
    %572 = vmatpush1.msra.mxu0 0.0
    %573 = vmatprep.subr.mxu0 0.0
    %574 = vmatpush1.msra.mxu0 0.0
    %575 = vmatprep.subr.mxu0 0.0
    %576 = vmatpush1.msra.mxu0 0.0
    %577 = vmatprep.mubr.f32.mxu0 0.0
    %578 = vmatmul.mubr.f32.gmra.mrb[0].mxu0 %v508
    %v579 = vpop.f32.mrb[0].mxu0
    %v580 = vadd.f32 0.0, %v579
    %v581 = vpop.f32.mrb[0].mxu0
    %582 = vmatprep.mubr.f32.mxu0 0.0
    %583 = vmatmul.mubr.f32.gmra.mrb[0].mxu0 %v511
    %v584 = vpop.f32.mrb[0].mxu0
    %v585 = vadd.f32 0.0, %v584
    %v586 = vpop.f32.mrb[0].mxu0
    %587 = vdwg.mxu0
    %v588 = vsel %vm151, %v580, 0.0
    %589 = vadd.xlane.f32.xlu0 %v588
    %v590 = vpop.xlane.xlu0 %589
    %v591 = vsel %vm151, %v585, 0.0
    %592 = vadd.xlane.f32.xlu0 %v591
    %v593 = vpop.xlane.xlu0 %592
    %v594 = vmul.f32 %v580, %v580
    %v595 = vmul.f32 %v585, %v585
    %v596 = vsel %vm151, %v594, 0.0
    %597 = vadd.xlane.f32.xlu0 %v596
    %v598 = vpop.xlane.xlu0 %597
    %v599 = vsel %vm151, %v595, 0.0
    %600 = vadd.xlane.f32.xlu0 %v599
    %v601 = vpop.xlane.xlu0 %600
    %v602 = vmul.f32 %v590, 0.03125
    %v603 = vmul.f32 %v593, 0.03125
    %v604 = vmul.f32 %v598, 0.03125
    %v605 = vmul.f32 %v601, 0.03125
    %v606 = vmul.f32 %v602, %v602
    %v607 = vmul.f32 %v603, %v603
    %v608 = vsub.f32 %v604, %v606
    %v609 = vsub.f32 %v605, %v607
    %v610 = vmax.f32 %v608, 0.0
    %v611 = vmax.f32 %v609, 0.0
    %v612 = vadd.f32 %v610, 1e-05
    %v613 = vadd.f32 %v611, 1e-05
    %v614 = vrsqrt.pop %v612
    %v615 = vrsqrt.pop %v613
    %v616 = vmul.f32 %v503, %v614
    %v617 = vmul.f32 %v504, %v615
    %v618 = vmul.f32 %v602, %v616
    %v619 = vmul.f32 %v603, %v617
    %v620 = vsub.f32 %v505, %v618
    %v621 = vsub.f32 %v506, %v619
    %623 = vset.pattern.permute.xlu0 0
    %624 = vperm.xlu0 %623, %v616
    %v625 = vpop.permute.xlu0 %624
    %628 = vset.pattern.permute.xlu0 0
    %629 = vperm.xlu0 %628, %v617
    %v630 = vpop.permute.xlu0 %629
    %v632 = vmul.f32 %v580, %v625
    %v633 = vmul.f32 %v585, %v630
    %635 = vset.pattern.permute.xlu0 0
    %636 = vperm.xlu0 %635, %v620
    %v637 = vpop.permute.xlu0 %636
    %640 = vset.pattern.permute.xlu0 0
    %641 = vperm.xlu0 %640, %v621
    %v642 = vpop.permute.xlu0 %641
    %v644 = vadd.f32 %v632, %v637
    %v645 = vadd.f32 %v633, %v642
    %646 = vst.msk [vmem:[#allocation2] sm:$0xff] %vm151, %v644
    %647 = vst.msk [vmem:[#allocation2 + $0x8] sm:$0xff] %vm151, %v645
    // Predicated region
    $region42: #{tpu_custom_call.1} parent=1 // pred_check
      _
    $region43: #{tpu_custom_call.1} parent=1 // pred_check_branch
      %649 = sbr.rel (0) target = $region45
    $region44: #{tpu_custom_call.1} parent=1 // pred_region
      %s651 = ssub.s32 256, 256
      %652 = vsyncadd [#allocation3], %s651
      %s653 = sshll.u32 [#allocation2], 4
      %s654 = int_to_ptr.vmem [resolvable:$true] %s653
      %659 = dma.vmem_to_hbm [thread:$0]  %s654, 256, %s10, [#allocation3], 128, 128, 8
    $region45: #{tpu_custom_call.1} parent=1 // pred_fallthru
      _
    // Predicated region
    $region46: #{tpu_custom_call.1} parent=1 // pred_check
      _
    $region47: #{tpu_custom_call.1} parent=1 // pred_check_branch
      %661 = sbr.rel (0) target = $region49
    $region48: #{tpu_custom_call.1} parent=1 // pred_region
      %662 = dma.done [#allocation3], 256
    $region49: #{tpu_custom_call.1} parent=1 // pred_fallthru
      _
    %663 = vsyncpa [#allocation3], 1

</llo_original>
